<compile_context>
chip_gen: v5e
topology: v5e:2x2
jax: 0.10.0
libtpu: 0.0.40
codegen_flags: <defaults>
</compile_context>

<pallas_src>
import functools

import jax
import jax.numpy as jnp
from jax.experimental import pallas as pl
from jax.experimental.pallas import tpu as pltpu


_NEG_LARGE = -1e30  # f32 sentinel bias for padded label lanes (exp underflows to 0)


def _round_up(x, m):
    return ((x + m - 1) // m) * m


def _vocab_tiling(V, tk_target):
    """Vocab (contraction) tile size, padded vocab, number of k tiles."""
    assert tk_target % 128 == 0
    if V <= tk_target:
        TK = _round_up(V, 128)
        return TK, TK, 1
    TK = tk_target
    Vp = _round_up(V, TK)
    return TK, Vp, Vp // TK


def _largest_aligned_divisor(n, cap):
    """Largest multiple of 8 that divides n and is <= cap (n multiple of 8)."""
    best, d = 8, 8
    while d <= min(n, cap):
        if n % d == 0:
            best = d
        d += 8
    return best


def prepare_bow_params(weight, bias, *, tk_target=2048, param_dtype=jnp.bfloat16):
    """One-time parameter prep (pad + cast OUTSIDE the per-call hot path).

    weight: [L, V] (PyTorch Linear layout), bias: [L].
    Returns a dict with the weight reshaped to [num_k, Lp, TK] in `param_dtype`
    and an f32 bias of shape [1, Lp] (padded label lanes hold -1e30).
    """
    L, V = weight.shape
    Lp = _round_up(max(L, 1), 8)
    TK, Vp, num_k = _vocab_tiling(V, tk_target)

    w = jnp.pad(weight.astype(param_dtype), ((0, Lp - L), (0, Vp - V)))
    w = w.reshape(Lp, num_k, TK).transpose(1, 0, 2)          # [num_k, Lp, TK]
    b = jnp.pad(bias.astype(jnp.float32), (0, Lp - L),
                constant_values=_NEG_LARGE).reshape(1, Lp)    # [1, Lp] f32

    return {"w": w, "b": b, "num_labels": L, "vocab_size": V, "tk": TK}


def bow_kernel(x_ref, w_ref, b_ref, o_ref, *, weight_resident, compute_dtype):
    """One (batch-tile i, vocab-tile k) grid step.

    x_ref: [TB, TK]              bag-of-words counts, vocab tile on lanes
    w_ref: [num_k, Lp, TK] (resident) or [1, Lp, TK] (streamed), vocab on lanes
    b_ref: [1, Lp]  f32 bias (padded label lanes = -1e30)
    o_ref: [TB, Lp] f32 output block, resident across the vocab grid axis and
                    used directly as the accumulator.
    """
    k = pl.program_id(1)

    @pl.when(k == 0)
    def _():
        o_ref[...] = jnp.zeros_like(o_ref)

    w_tile = w_ref[k] if weight_resident else w_ref[0]        # [Lp, TK]
    x_tile = x_ref[...].astype(compute_dtype)                 # on-chip cast (VPU)

    # x @ W^T without materializing weight.T: contract the vocab (lane) axis
    # of both operands; f32 accumulation on the MXU.
    # TODO(synk): verify via pl.lower_as_mlir that this transposed-RHS
    # contraction emits no per-k XLU transposes; if it does, pre-transpose in
    # prepare_bow_params (amortized) instead.
    o_ref[...] += jax.lax.dot_general(
        x_tile, w_tile,
        dimension_numbers=(((1,), (1,)), ((), ())),
        preferred_element_type=jnp.float32,
    )

    @pl.when(k == pl.num_programs(1) - 1)
    def _():
        logits = o_ref[...] + b_ref[...]                      # f32
        m = jnp.max(logits, axis=1, keepdims=True)
        shifted = logits - m
        lse = jnp.log(jnp.sum(jnp.exp(shifted), axis=1, keepdims=True))
        o_ref[...] = shifted - lse


def bow_classifier_forward(bow_vec, params, *, tb_target=512):
    """log_softmax(bow_vec @ weight.T + bias, axis=1) -> [B, L] f32.

    bow_vec: [B, V] in any float dtype (pass bf16 to halve its HBM traffic);
    params: output of prepare_bow_params.
    """
    w, b = params["w"], params["b"]
    L, V, TK = params["num_labels"], params["vocab_size"], params["tk"]
    num_k, Lp, _ = w.shape
    Vp = num_k * TK

    B, Vin = bow_vec.shape
    assert Vin == V, f"bow_vec vocab dim {Vin} != prepared vocab {V}"

    # ---- batch tiling ------------------------------------------------------
    Bp = _round_up(B, 8)
    if Bp <= tb_target:
        # Split into 2 tiles when cleanly possible so v7x's 2 TCs both get work.
        TB = Bp // 2 if (Bp >= 16 and Bp % 16 == 0) else Bp
    else:
        TB = _largest_aligned_divisor(Bp, tb_target)
        if TB < min(128, tb_target):
            # Divisors of Bp are awkward; accept modest padding over many tiny tiles.
            TB = tb_target
            Bp = _round_up(Bp, TB)

    # ---- pad x only if strictly required (zero-padding is exact) ----------
    x = bow_vec
    if (Bp != B) or (Vp != V):
        # TODO(synk): for large habitually-misaligned inputs, mask the tail
        # block in-kernel instead of paying this extra HBM pass.
        x = jnp.pad(x, ((0, Bp - B), (0, Vp - V)))

    grid = (Bp // TB, num_k)

    # ---- weight residency decision ----------------------------------------
    weight_bytes = w.size * w.dtype.itemsize
    weight_resident = weight_bytes <= (8 << 20)   # 2x-buffered still < 16 MiB
    if weight_resident:
        w_spec = pl.BlockSpec((num_k, Lp, TK), lambda i, k: (0, 0, 0))
    else:
        w_spec = pl.BlockSpec((1, Lp, TK), lambda i, k: (k, 0, 0))

    kernel = functools.partial(
        bow_kernel, weight_resident=weight_resident, compute_dtype=w.dtype)

    num_i = Bp // TB
    x_bytes = x.size * x.dtype.itemsize
    cost = pl.CostEstimate(
        flops=2 * Bp * Vp * Lp,
        transcendentals=Bp * Lp + Bp,               # exp + log
        bytes_accessed=(x_bytes
                        + (weight_bytes if weight_resident else num_i * weight_bytes)
                        + b.size * b.dtype.itemsize
                        + Bp * Lp * 4),
    )

    out_p = pl.pallas_call(
        kernel,
        out_shape=jax.ShapeDtypeStruct((Bp, Lp), jnp.float32),
        grid_spec=pltpu.PrefetchScalarGridSpec(
            num_scalar_prefetch=0,
            grid=grid,
            in_specs=[
                pl.BlockSpec((TB, TK), lambda i, k: (i, k)),   # bow_vec tile
                w_spec,                                        # weight (resident/stream)
                pl.BlockSpec((1, Lp), lambda i, k: (0, 0)),    # bias (resident)
            ],
            out_specs=pl.BlockSpec((TB, Lp), lambda i, k: (i, 0)),
        ),
        compiler_params=pltpu.CompilerParams(
            dimension_semantics=("parallel", "arbitrary"),
            # v5e's default scoped VMEM is 16 MiB; raise it so larger tiles /
            # the resident weight fit, but stay under v7x's 64 MiB physical.
            vmem_limit_bytes=48 * 1024 * 1024,
        ),
        cost_estimate=cost,
    )(x, w, b)

    return out_p[:B, :L]


def bow_classifier_apply(bow_vec, weight, bias, **kwargs):
    """Convenience one-shot wrapper (in real use, prepare params once)."""
    return bow_classifier_forward(bow_vec, prepare_bow_params(weight, bias), **kwargs)


if __name__ == "__main__":
    # Small shapes consistent with the module: batch=8, vocab_size=128, num_labels=8.
    B, VOCAB, LABELS = 8, 128, 8

    key = jax.random.PRNGKey(0)
    k_x, k_w, k_b = jax.random.split(key, 3)

    # nn.Linear default init: U(-1/sqrt(in_features), 1/sqrt(in_features)).
    bound = 1.0 / jnp.sqrt(jnp.float32(VOCAB))
    weight = jax.random.uniform(k_w, (LABELS, VOCAB), jnp.float32, -bound, bound)
    bias = jax.random.uniform(k_b, (LABELS,), jnp.float32, -bound, bound)

    # Bag-of-words counts (non-negative small integers), f32 like PyTorch default.
    bow_vec = jax.random.randint(k_x, (B, VOCAB), 0, 5).astype(jnp.float32)

    params = prepare_bow_params(weight, bias)          # one-time prep (bf16 weight)
    out = bow_classifier_forward(bow_vec, params)
    out = jax.block_until_ready(out)
    assert out.shape == (B, LABELS)

    # Reference 1: exact module semantics in f32 (tolerance covers bf16 weight rounding).
    ref = jax.nn.log_softmax(bow_vec @ weight.T + bias, axis=1)
    assert jnp.allclose(out, ref, atol=5e-2, rtol=1e-2), "mismatch vs f32 reference"

    # Reference 2: same computation with bf16-rounded operands (tight check of the kernel).
    w_rt = weight.astype(jnp.bfloat16).astype(jnp.float32)
    x_rt = bow_vec.astype(jnp.bfloat16).astype(jnp.float32)
    ref_rt = jax.nn.log_softmax(x_rt @ w_rt.T + bias, axis=1)
    assert jnp.allclose(out, ref_rt, atol=1e-3, rtol=1e-3), "mismatch vs bf16-rounded reference"

    print("KERNEL_OK")
</pallas_src>

<mosaic_0001>
module attributes {stable_mosaic.version = 11 : i64} {
  func.func @bow_kernel(%arg0: i32, %arg1: i32, %arg2: memref<8x128xf32, #tpu.memory_space<vmem>>, %arg3: memref<1x8x128xbf16, #tpu.memory_space<vmem>>, %arg4: memref<1x8xf32, #tpu.memory_space<vmem>>, %arg5: memref<8x8xf32, #tpu.memory_space<vmem>>) attributes {dimension_semantics = [#tpu.dimension_semantics<parallel>, #tpu.dimension_semantics<arbitrary>], iteration_bounds = array<i64: 1, 1>, scalar_prefetch = 0 : i64, scratch_operands = 0 : i64, tpu.core_type = #tpu.core_type<tc>, window_params = [{transform_indices = @transform_0, window_bounds = array<i64: 8, 128>}, {pipeline_mode = #tpu.pipeline_mode<synchronous>, transform_indices = @transform_1, window_bounds = array<i64: 1, 8, 128>}, {pipeline_mode = #tpu.pipeline_mode<synchronous>, transform_indices = @transform_2, window_bounds = array<i64: 1, 8>}, {transform_indices = @transform_3, window_bounds = array<i64: 8, 8>}]} {
    %c0_i32 = arith.constant 0 : i32
    %0 = arith.cmpi eq, %arg1, %c0_i32 : i32
    %1 = arith.extui %0 : i1 to i32
    %c0_i32_0 = arith.constant 0 : i32
    %2 = arith.cmpi ne, %1, %c0_i32_0 : i32
    scf.if %2 {
      %cst_10 = arith.constant 0.000000e+00 : f32
      %15 = vector.broadcast %cst_10 : f32 to vector<8x8xf32>
      %c0_11 = arith.constant 0 : index
      %c0_12 = arith.constant 0 : index
      %16 = vector.load %arg5[%c0_11, %c0_12] : memref<8x8xf32, #tpu.memory_space<vmem>>, vector<8x8xf32>
      tpu.vector_store %arg5[%c0_11, %c0_12], %15 {strides = array<i32>} : memref<8x8xf32, #tpu.memory_space<vmem>>, vector<8x8xf32>,
    } else {
    }
    %3 = arith.index_cast %arg1 : i32 to index
    %c0 = arith.constant 0 : index
    %c0_1 = arith.constant 0 : index
    %4 = vector.load %arg3[%3, %c0, %c0_1] : memref<1x8x128xbf16, #tpu.memory_space<vmem>>, vector<1x8x128xbf16>
    %5 = vector.shape_cast %4 : vector<1x8x128xbf16> to vector<8x128xbf16>
    %c0_2 = arith.constant 0 : index
    %c0_3 = arith.constant 0 : index
    %6 = vector.load %arg2[%c0_2, %c0_3] : memref<8x128xf32, #tpu.memory_space<vmem>>, vector<8x128xf32>
    %7 = arith.truncf %6 : vector<8x128xf32> to vector<8x128xbf16>
    %c0_4 = arith.constant 0 : index
    %c0_5 = arith.constant 0 : index
    %8 = vector.load %arg5[%c0_4, %c0_5] : memref<8x8xf32, #tpu.memory_space<vmem>>, vector<8x8xf32>
    %cst = arith.constant dense<0.000000e+00> : vector<8x8xf32>
    %9 = tpu.matmul %7, %5, %cst {dimension_numbers = #tpu.dot_dimension_numbers<[1], [1], [0], [0], [0, 0, 1, 0], [], []>} : vector<8x128xbf16>, vector<8x128xbf16>, vector<8x8xf32> -> vector<8x8xf32>
    %10 = arith.addf %8, %9 : vector<8x8xf32>
    %c0_6 = arith.constant 0 : index
    %c0_7 = arith.constant 0 : index
    %11 = vector.load %arg5[%c0_6, %c0_7] : memref<8x8xf32, #tpu.memory_space<vmem>>, vector<8x8xf32>
    tpu.vector_store %arg5[%c0_6, %c0_7], %10 {strides = array<i32>} : memref<8x8xf32, #tpu.memory_space<vmem>>, vector<8x8xf32>,
    %c0_i32_8 = arith.constant 0 : i32
    %12 = arith.cmpi eq, %arg1, %c0_i32_8 : i32
    %13 = arith.extui %12 : i1 to i32
    %c0_i32_9 = arith.constant 0 : i32
    %14 = arith.cmpi ne, %13, %c0_i32_9 : i32
    scf.if %14 {
      %c0_10 = arith.constant 0 : index
      %c0_11 = arith.constant 0 : index
      %15 = vector.load %arg5[%c0_10, %c0_11] : memref<8x8xf32, #tpu.memory_space<vmem>>, vector<8x8xf32>
      %c0_12 = arith.constant 0 : index
      %c0_13 = arith.constant 0 : index
      %16 = vector.load %arg4[%c0_12, %c0_13] : memref<1x8xf32, #tpu.memory_space<vmem>>, vector<1x8xf32>
      %17 = vector.broadcast %16 : vector<1x8xf32> to vector<8x8xf32>
      %18 = arith.addf %15, %17 : vector<8x8xf32>
      %cst_14 = arith.constant dense<0xFF800000> : vector<8xf32>
      %19 = vector.multi_reduction <maximumf>, %18, %cst_14 [1] : vector<8x8xf32> to vector<8xf32>
      %20 = vector.shape_cast %19 : vector<8xf32> to vector<8x1xf32>
      %21 = vector.broadcast %20 : vector<8x1xf32> to vector<8x8xf32>
      %22 = arith.subf %18, %21 : vector<8x8xf32>
      %23 = math.exp %22 : vector<8x8xf32>
      %cst_15 = arith.constant dense<0.000000e+00> : vector<8xf32>
      %24 = vector.multi_reduction <add>, %23, %cst_15 [1] : vector<8x8xf32> to vector<8xf32>
      %25 = vector.shape_cast %24 : vector<8xf32> to vector<8x1xf32>
      %26 = math.log %25 : vector<8x1xf32>
      %27 = vector.broadcast %26 : vector<8x1xf32> to vector<8x8xf32>
      %28 = arith.subf %22, %27 : vector<8x8xf32>
      %c0_16 = arith.constant 0 : index
      %c0_17 = arith.constant 0 : index
      %29 = vector.load %arg5[%c0_16, %c0_17] : memref<8x8xf32, #tpu.memory_space<vmem>>, vector<8x8xf32>
      tpu.vector_store %arg5[%c0_16, %c0_17], %28 {strides = array<i32>} : memref<8x8xf32, #tpu.memory_space<vmem>>, vector<8x8xf32>,
    } else {
    }
    return
  }
  func.func @transform_0(%arg0: i32, %arg1: i32) -> (i32, i32) {
    %c0_i32 = arith.constant 0 : i32
    return %arg0, %arg1 : i32, i32
  }
  func.func @transform_1(%arg0: i32, %arg1: i32) -> (i32, i32, i32) {
    %c0_i32 = arith.constant 0 : i32
    %c0_i32_0 = arith.constant 0 : i32
    %c0_i32_1 = arith.constant 0 : i32
    %c0_i32_2 = arith.constant 0 : i32
    return %c0_i32, %c0_i32_0, %c0_i32_1 : i32, i32, i32
  }
  func.func @transform_2(%arg0: i32, %arg1: i32) -> (i32, i32) {
    %c0_i32 = arith.constant 0 : i32
    %c0_i32_0 = arith.constant 0 : i32
    %c0_i32_1 = arith.constant 0 : i32
    return %c0_i32, %c0_i32_0 : i32, i32
  }
  func.func @transform_3(%arg0: i32, %arg1: i32) -> (i32, i32) {
    %c0_i32 = arith.constant 0 : i32
    %c0_i32_0 = arith.constant 0 : i32
    return %arg0, %c0_i32 : i32, i32
  }
}

</mosaic_0001>

<llo_original>
// kernel: tpu_custom_call.1
$region0: #{tpu_custom_call.1}
  #allocation0 [shape = 'u32[]', space=smem, size = 0x4, offset = 0x4, fixed_abs, tag = 'smem constant byte address 0x4 - core index']
  #allocation1 [shape = 'u32[72,128]{1,0:T(1,128)}', space=vmem, size = 0x9000, scoped, tag = 'internal scratch']
  %s0 = inlined_call_operand.hbm [shape: f32[8,128], index: 0, kind: input, shape index: {}]
  %s1 = inlined_call_operand.hbm [shape: bf16[1,8,128], index: 1, kind: input, shape index: {}]
  %s2 = inlined_call_operand.vmem [shape: f32[1,8], index: 2, kind: input, shape index: {}]
  %s3 = inlined_call_operand.hbm [shape: f32[8,8], index: 3, kind: output, shape index: {}]
  %s4 = sld [smem:[#allocation0]]
  $region38: #{tpu_custom_call.1} parent=0
    _
  %s6 = ssub.s32 1, %s4
  %s7 = scalar_select 0, %s6, %s4
  $region1: #{tpu_custom_call.1} parent=0
    #allocation2 [shape = 'u8[4096]{0}', space=vmem, size = 0x1000, scoped, tag = 'input window, operand 0, single buffered']
    #allocation3 [shape = 's32[1]{0}', space=sflag, size = 0x4, scoped, tag = 'scoped memory for tpu_custom_call.1']
    #allocation4 [shape = 's32[1]{0}', space=sflag, size = 0x4, scoped, tag = 'scoped memory for tpu_custom_call.1']
    #allocation5 [shape = 'u8[2048]{0}', space=vmem, size = 0x800, scoped, tag = 'input window, operand 1, single buffered']
    #allocation6 [shape = 's32[1]{0}', space=sflag, size = 0x4, scoped, tag = 'scoped memory for tpu_custom_call.1']
    #allocation7 [shape = 'u8[4096]{0}', space=vmem, size = 0x1000, scoped, tag = 'output window, operand 0, single buffered']
    %8 = vsyncpa [#allocation3], 0
    %9 = vsyncpa [#allocation6], 0
    %10 = vsyncpa [#allocation4], 0
    // Predicated region
    $region2: #{tpu_custom_call.1} parent=1 // pred_check
      _
    $region3: #{tpu_custom_call.1} parent=1 // pred_check_branch
      %12 = sbr.rel (0) target = $region5
    $region4: #{tpu_custom_call.1} parent=1 // pred_region
      %14 = vsyncadd [#allocation3], 0
      %s16 = sshll.u32 %s0, 4
      %s17 = int_to_ptr.hbm [resolvable:$true] %s16
      %s18 = sshll.u32 [#allocation2], 4
      %s19 = int_to_ptr.vmem [resolvable:$true] %s18
      %21 = dma.hbm_to_vmem [thread:$0]  %s17, 128, %s19, [#allocation3]
    $region5: #{tpu_custom_call.1} parent=1 // pred_fallthru
      _
    // Predicated region
    $region6: #{tpu_custom_call.1} parent=1 // pred_check
      _
    $region7: #{tpu_custom_call.1} parent=1 // pred_check_branch
      %23 = sbr.rel (0) target = $region9
    $region8: #{tpu_custom_call.1} parent=1 // pred_region
      %25 = vsyncadd [#allocation6], 0
      %s27 = sshll.u32 %s1, 4
      %s28 = int_to_ptr.hbm [resolvable:$true] %s27
      %s29 = sshll.u32 [#allocation5], 4
      %s30 = int_to_ptr.vmem [resolvable:$true] %s29
      %32 = dma.hbm_to_vmem [thread:$0]  %s28, 64, %s30, [#allocation6]
    $region9: #{tpu_custom_call.1} parent=1 // pred_fallthru
      _
    // Predicated region
    $region10: #{tpu_custom_call.1} parent=1 // pred_check
      _
    $region11: #{tpu_custom_call.1} parent=1 // pred_check_branch
      %34 = sbr.rel (0) target = $region13
    $region12: #{tpu_custom_call.1} parent=1 // pred_region
      _
    $region13: #{tpu_custom_call.1} parent=1 // pred_fallthru
      _
    // Predicated region
    $region14: #{tpu_custom_call.1} parent=1 // pred_check
      _
    $region15: #{tpu_custom_call.1} parent=1 // pred_check_branch
      %36 = sbr.rel (0) target = $region17
    $region16: #{tpu_custom_call.1} parent=1 // pred_region
      %38 = dma.done [#allocation3], 128
    $region17: #{tpu_custom_call.1} parent=1 // pred_fallthru
      _
    // Predicated region
    $region18: #{tpu_custom_call.1} parent=1 // pred_check
      _
    $region19: #{tpu_custom_call.1} parent=1 // pred_check_branch
      %40 = sbr.rel (0) target = $region21
    $region20: #{tpu_custom_call.1} parent=1 // pred_region
      %42 = dma.done [#allocation6], 64
    $region21: #{tpu_custom_call.1} parent=1 // pred_fallthru
      _
    %p44 = scmp.eq.s32.totalorder 0, 0
    // Predicated region
    $region22: #{tpu_custom_call.1} parent=1 // pred_check
      %p45 = pneg %p44
    $region23: #{tpu_custom_call.1} parent=1 // pred_check_branch
      %47 = sbr.rel (%p45) target = $region25
    $region24: #{tpu_custom_call.1} parent=1 // pred_region
      %vm48 = vcmask 64512
      %49 = vst.msk [vmem:[#allocation7] sm:$0xff] %vm48, 0.0
    $region25: #{tpu_custom_call.1} parent=1 // pred_fallthru
      _
    %v50 = vld [vmem:[#allocation5] sm:$0xf]
    %v51 = vld [vmem:[#allocation2] sm:$0xff]
    %v52 = vpack.c.bf16 %v51, %v51
    %v53 = vld [vmem:[#allocation7] sm:$0xff]
    %54 = vmatpush.bf16.xpose.msra.mxu0 0
    %55 = vmatpush.bf16.xpose.msra.mxu0 0
    %56 = vmatpush.bf16.xpose.msra.mxu0 0
    %57 = vmatpush.bf16.xpose.msra.mxu0 0
    %58 = vmatpush.bf16.xpose.msra.mxu0 0
    %59 = vmatpush.bf16.xpose.msra.mxu0 0
    %60 = vmatpush.bf16.xpose.msra.mxu0 0
    %61 = vmatpush.bf16.xpose.msra.mxu0 %v50
    %62 = vmatmul.bf16.gmra.mxu0 %v52
    %v63 = vpop.f32.mrf.mxu0
    %v64 = vadd.f32 0.0, %v63
    %v65 = vpop.f32.mrf.mxu0
    %66 = vdwg.mxu0
    %v67 = vadd.f32 %v53, %v64
    %vm68 = vcmask 64512
    %69 = vst.msk [vmem:[#allocation7] sm:$0xff] %vm68, %v67
    // Predicated region
    $region26: #{tpu_custom_call.1} parent=1 // pred_check
      %p70 = pneg %p44
    $region27: #{tpu_custom_call.1} parent=1 // pred_check_branch
      %72 = sbr.rel (%p70) target = $region29
    $region28: #{tpu_custom_call.1} parent=1 // pred_region
      %v73 = vld [vmem:[#allocation7] sm:$0xff]
      %v74 = vld [vmem:[%s2] sm:$0x1]
      %v76 = vperm.slane %v74, 0
      %v78 = vadd.f32 %v73, %v76
      %v79 = vsel %vm68, %v78, -inf
      %80 = vmax.xlane.f32.xlu0 %v79
      %v81 = vpop.xlane.xlu0 %80
      %v82 = vsub.f32 %v78, %v81
      %v83 = vmul.f32 %v82, 1.442695
      %v84 = vpow.pop %v83
      %v85 = vsel %vm68, %v84, 0.0
      %86 = vadd.xlane.f32.xlu0 %v85
      %v87 = vpop.xlane.xlu0 %86
      %v88 = vlog2.pop %v87
      %v89 = vmul.f32 %v88, 0.6931472
      %v90 = vsub.f32 %v82, %v89
      %91 = vst.msk [vmem:[#allocation7] sm:$0xff] %vm68, %v90
    $region29: #{tpu_custom_call.1} parent=1 // pred_fallthru
      _
    // Predicated region
    $region30: #{tpu_custom_call.1} parent=1 // pred_check
      _
    $region31: #{tpu_custom_call.1} parent=1 // pred_check_branch
      %93 = sbr.rel (0) target = $region33
    $region32: #{tpu_custom_call.1} parent=1 // pred_region
      %95 = vsyncadd [#allocation4], 0
      %s97 = sshll.u32 [#allocation7], 4
      %s98 = int_to_ptr.vmem [resolvable:$true] %s97
      %s99 = sshll.u32 %s3, 4
      %s100 = int_to_ptr.hbm [resolvable:$true] %s99
      %102 = dma.vmem_to_hbm [thread:$0]  %s98, 128, %s100, [#allocation4]
    $region33: #{tpu_custom_call.1} parent=1 // pred_fallthru
      _
    // Predicated region
    $region34: #{tpu_custom_call.1} parent=1 // pred_check
      _
    $region35: #{tpu_custom_call.1} parent=1 // pred_check_branch
      %104 = sbr.rel (0) target = $region37
    $region36: #{tpu_custom_call.1} parent=1 // pred_region
      %106 = dma.done [#allocation4], 128
    $region37: #{tpu_custom_call.1} parent=1 // pred_fallthru
      _
    %107 = vsyncpa [#allocation3], 1
    %108 = vsyncpa [#allocation6], 1
    %109 = vsyncpa [#allocation4], 1

</llo_original>
